<compile_context>
chip_gen: v6e
topology: v6e:2x2x1
jax: 0.10.0
libtpu: 0.0.40
codegen_flags: <defaults>
</compile_context>

<pallas_src>
import jax
import jax.numpy as jnp
from jax.experimental import pallas as pl
from jax.experimental.pallas import tpu as pltpu


def _discriminator_kernel(s_idx_ref, a_idx_ref,
                          w_eff_ref, w1a_ref, b1_ref,
                          w2_ref, b2_ref,
                          w3_ref, b3_ref,
                          w4_ref, b4_ref,
                          out_ref):
    tm = s_idx_ref.shape[0]
    S = w_eff_ref.shape[0]
    A = w1a_ref.shape[0]

    # Build one-hot encodings in-kernel from int32 indices (VPU iota-compare).
    s_idx = s_idx_ref[...]                                         # (TM, 1) int32
    a_idx = a_idx_ref[...]                                         # (TM, 1) int32
    s_oh = (jax.lax.broadcasted_iota(jnp.int32, (tm, S), 1) == s_idx).astype(jnp.bfloat16)
    a_oh = (jax.lax.broadcasted_iota(jnp.int32, (tm, A), 1) == a_idx).astype(jnp.bfloat16)

    # fc1 over concat([emb(state), one_hot(action)]) with the embedding folded
    # into W_eff = emb @ W1_state:   s_oh @ W_eff + a_oh @ W1_action + b1
    h = (jnp.dot(s_oh, w_eff_ref[...], preferred_element_type=jnp.float32)
         + jnp.dot(a_oh, w1a_ref[...], preferred_element_type=jnp.float32)
         + b1_ref[...])
    h = jnp.maximum(h, 0.0)

    # fc2
    h = jnp.dot(h.astype(jnp.bfloat16), w2_ref[...],
                preferred_element_type=jnp.float32) + b2_ref[...]
    h = jnp.maximum(h, 0.0)

    # fc3
    h = jnp.dot(h.astype(jnp.bfloat16), w3_ref[...],
                preferred_element_type=jnp.float32) + b3_ref[...]
    h = jnp.maximum(h, 0.0)

    # fc4 + sigmoid  -> (TM, 1); divide goes to the EUP via approx reciprocal.
    logits = jnp.dot(h.astype(jnp.bfloat16), w4_ref[...],
                     preferred_element_type=jnp.float32) + b4_ref[...]
    out_ref[...] = pl.reciprocal(1.0 + jnp.exp(-logits), approx=True)


def _round_up(x, m):
    return ((x + m - 1) // m) * m


def discriminator_forward(state, action, params, *, block_b=256):
    """state: int (B,), action: int (B,)  ->  prob float32 (B, 1)."""
    B = state.shape[0]
    S, H = params["w_eff"].shape
    A = params["w1a"].shape[0]

    # Batch tile: >=256 for real workloads, rounded-up-to-8 whole batch when tiny.
    tm = block_b if B >= block_b else _round_up(B, 8)
    padded_b = _round_up(B, tm)
    pad = padded_b - B
    s_idx = jnp.pad(state.astype(jnp.int32), (0, pad)).reshape(padded_b, 1)
    a_idx = jnp.pad(action.astype(jnp.int32), (0, pad)).reshape(padded_b, 1)

    row_spec = pl.BlockSpec((tm, 1), lambda i: (i, 0))

    def const_spec(shape):
        # Weights/biases: same block every grid step -> stay VMEM-resident.
        return pl.BlockSpec(shape, lambda i: (0, 0))

    operands = (s_idx, a_idx,
                params["w_eff"], params["w1a"], params["b1"],
                params["w2"], params["b2"],
                params["w3"], params["b3"],
                params["w4"], params["b4"])
    in_specs = [row_spec, row_spec,
                const_spec((S, H)), const_spec((A, H)), const_spec((1, H)),
                const_spec((H, H)), const_spec((1, H)),
                const_spec((H, H)), const_spec((1, H)),
                const_spec((H, 1)), const_spec((1, 1))]

    matmul_flops = 2 * padded_b * (S * H + A * H + 2 * H * H + H)
    bytes_accessed = (2 * padded_b * 4            # int32 index inputs
                      + padded_b * 4              # f32 prob output
                      + 2 * (S * H + A * H + 2 * H * H + H)   # bf16 weights
                      + 4 * (3 * H + 1))          # f32 biases

    # TODO(synk): output stays (TM, 1) -> masked vst; a lane-dense (num_tiles, TM)
    # slab would need an in-kernel sublane->lane relayout for a tiny further win.
    out = pl.pallas_call(
        _discriminator_kernel,
        out_shape=jax.ShapeDtypeStruct((padded_b, 1), jnp.float32),
        grid=(padded_b // tm,),
        in_specs=in_specs,
        out_specs=row_spec,
        compiler_params=pltpu.CompilerParams(
            dimension_semantics=("parallel",)),
        cost_estimate=pl.CostEstimate(
            flops=matmul_flops,
            transcendentals=2 * padded_b,
            bytes_accessed=bytes_accessed),
    )(*operands)
    return out[:B]


def init_params(key, state_dim, action_dim, hidden):
    ks = jax.random.split(key, 5)

    def lin(k, fan_in, fan_out):
        bound = 1.0 / jnp.sqrt(jnp.float32(fan_in))
        kw, kb = jax.random.split(k)
        w = jax.random.uniform(kw, (fan_in, fan_out), jnp.float32, -bound, bound)
        b = jax.random.uniform(kb, (1, fan_out), jnp.float32, -bound, bound)
        return w, b

    emb = jax.random.normal(ks[0], (state_dim, hidden), jnp.float32)
    w1, b1 = lin(ks[1], hidden + action_dim, hidden)
    w1s, w1a = w1[:hidden, :], w1[hidden:, :]       # split fc1: state half / action half
    w2, b2 = lin(ks[2], hidden, hidden)
    w3, b3 = lin(ks[3], hidden, hidden)
    w4, b4 = lin(ks[4], hidden, 1)

    # One-time offline fold of the embedding into fc1's state half:
    #   one_hot(s) @ (emb @ w1s) == emb[s] @ w1s   exactly for one-hot rows.
    w_eff = jnp.dot(emb, w1s)                       # (state_dim, hidden)

    bf16 = jnp.bfloat16
    return dict(w_eff=w_eff.astype(bf16), w1a=w1a.astype(bf16), b1=b1,
                w2=w2.astype(bf16), b2=b2,
                w3=w3.astype(bf16), b3=b3,
                w4=w4.astype(bf16), b4=b4)


if __name__ == "__main__":
    state_dim, action_dim, hidden = 16, 4, 32
    batch = 8

    key = jax.random.PRNGKey(0)
    k_params, k_state, k_action = jax.random.split(key, 3)

    params = init_params(k_params, state_dim, action_dim, hidden)
    state = jax.random.randint(k_state, (batch,), 0, state_dim, dtype=jnp.int32)
    action = jax.random.randint(k_action, (batch,), 0, action_dim, dtype=jnp.int32)

    prob = discriminator_forward(state, action, params)
    jax.block_until_ready(prob)

    # Pure-JAX reference mirroring the kernel's numeric pipeline
    # (bf16 dot inputs, f32 accumulate/bias/relu).
    f32 = lambda x: x.astype(jnp.float32)
    s_oh = jax.nn.one_hot(state, state_dim, dtype=jnp.float32)
    a_oh = jax.nn.one_hot(action, action_dim, dtype=jnp.float32)
    h = jax.nn.relu(s_oh @ f32(params["w_eff"]) + a_oh @ f32(params["w1a"]) + params["b1"])
    h = jax.nn.relu(f32(h.astype(jnp.bfloat16)) @ f32(params["w2"]) + params["b2"])
    h = jax.nn.relu(f32(h.astype(jnp.bfloat16)) @ f32(params["w3"]) + params["b3"])
    ref = jax.nn.sigmoid(f32(h.astype(jnp.bfloat16)) @ f32(params["w4"]) + params["b4"])

    assert prob.shape == (batch, 1)
    assert jnp.allclose(prob, ref, atol=5e-3), (prob, ref)

    print("KERNEL_OK")
</pallas_src>

<mosaic_0001>
module attributes {stable_mosaic.version = 11 : i64} {
  func.func @_discriminator_kernel(%arg0: i32, %arg1: memref<8x1xi32, #tpu.memory_space<vmem>>, %arg2: memref<8x1xi32, #tpu.memory_space<vmem>>, %arg3: memref<16x32xbf16, #tpu.memory_space<vmem>>, %arg4: memref<4x32xbf16, #tpu.memory_space<vmem>>, %arg5: memref<1x32xf32, #tpu.memory_space<vmem>>, %arg6: memref<32x32xbf16, #tpu.memory_space<vmem>>, %arg7: memref<1x32xf32, #tpu.memory_space<vmem>>, %arg8: memref<32x32xbf16, #tpu.memory_space<vmem>>, %arg9: memref<1x32xf32, #tpu.memory_space<vmem>>, %arg10: memref<32x1xbf16, #tpu.memory_space<vmem>>, %arg11: memref<1x1xf32, #tpu.memory_space<vmem>>, %arg12: memref<8x1xf32, #tpu.memory_space<vmem>>) attributes {dimension_semantics = [#tpu.dimension_semantics<parallel>], iteration_bounds = array<i64: 1>, scalar_prefetch = 0 : i64, scratch_operands = 0 : i64, tpu.core_type = #tpu.core_type<tc>, window_params = [{transform_indices = @transform_0, window_bounds = array<i64: 8, 1>}, {transform_indices = @transform_1, window_bounds = array<i64: 8, 1>}, {pipeline_mode = #tpu.pipeline_mode<synchronous>, transform_indices = @transform_2, window_bounds = array<i64: 16, 32>}, {pipeline_mode = #tpu.pipeline_mode<synchronous>, transform_indices = @transform_3, window_bounds = array<i64: 4, 32>}, {pipeline_mode = #tpu.pipeline_mode<synchronous>, transform_indices = @transform_4, window_bounds = array<i64: 1, 32>}, {pipeline_mode = #tpu.pipeline_mode<synchronous>, transform_indices = @transform_5, window_bounds = array<i64: 32, 32>}, {pipeline_mode = #tpu.pipeline_mode<synchronous>, transform_indices = @transform_6, window_bounds = array<i64: 1, 32>}, {pipeline_mode = #tpu.pipeline_mode<synchronous>, transform_indices = @transform_7, window_bounds = array<i64: 32, 32>}, {pipeline_mode = #tpu.pipeline_mode<synchronous>, transform_indices = @transform_8, window_bounds = array<i64: 1, 32>}, {pipeline_mode = #tpu.pipeline_mode<synchronous>, transform_indices = @transform_9, window_bounds = array<i64: 32, 1>}, {pipeline_mode = #tpu.pipeline_mode<synchronous>, transform_indices = @transform_10, window_bounds = array<i64: 1, 1>}, {transform_indices = @transform_11, window_bounds = array<i64: 8, 1>}]} {
    %c0 = arith.constant 0 : index
    %c0_0 = arith.constant 0 : index
    %0 = vector.load %arg1[%c0, %c0_0] : memref<8x1xi32, #tpu.memory_space<vmem>>, vector<8x1xi32>
    %c0_1 = arith.constant 0 : index
    %c0_2 = arith.constant 0 : index
    %1 = vector.load %arg2[%c0_1, %c0_2] : memref<8x1xi32, #tpu.memory_space<vmem>>, vector<8x1xi32>
    %2 = tpu.iota {dimensions = array<i32: 1>} : vector<8x16xi32>
    %3 = vector.broadcast %0 : vector<8x1xi32> to vector<8x16xi32>
    %4 = arith.cmpi eq, %2, %3 : vector<8x16xi32>
    %5 = arith.extui %4 : vector<8x16xi1> to vector<8x16xi32>
    %6 = arith.sitofp %5 : vector<8x16xi32> to vector<8x16xf32>
    %7 = arith.truncf %6 : vector<8x16xf32> to vector<8x16xbf16>
    %8 = tpu.iota {dimensions = array<i32: 1>} : vector<8x4xi32>
    %9 = vector.broadcast %1 : vector<8x1xi32> to vector<8x4xi32>
    %10 = arith.cmpi eq, %8, %9 : vector<8x4xi32>
    %11 = arith.extui %10 : vector<8x4xi1> to vector<8x4xi32>
    %12 = arith.sitofp %11 : vector<8x4xi32> to vector<8x4xf32>
    %13 = arith.truncf %12 : vector<8x4xf32> to vector<8x4xbf16>
    %c0_3 = arith.constant 0 : index
    %c0_4 = arith.constant 0 : index
    %14 = vector.load %arg3[%c0_3, %c0_4] : memref<16x32xbf16, #tpu.memory_space<vmem>>, vector<16x32xbf16>
    %cst = arith.constant dense<0.000000e+00> : vector<8x32xf32>
    %15 = tpu.matmul %7, %14, %cst {dimension_numbers = #tpu.dot_dimension_numbers<[1], [0], [0], [1], [0, 0, 1, 1], [], []>} : vector<8x16xbf16>, vector<16x32xbf16>, vector<8x32xf32> -> vector<8x32xf32>
    %c0_5 = arith.constant 0 : index
    %c0_6 = arith.constant 0 : index
    %16 = vector.load %arg4[%c0_5, %c0_6] : memref<4x32xbf16, #tpu.memory_space<vmem>>, vector<4x32xbf16>
    %cst_7 = arith.constant dense<0.000000e+00> : vector<8x32xf32>
    %17 = tpu.matmul %13, %16, %cst_7 {dimension_numbers = #tpu.dot_dimension_numbers<[1], [0], [0], [1], [0, 0, 1, 1], [], []>} : vector<8x4xbf16>, vector<4x32xbf16>, vector<8x32xf32> -> vector<8x32xf32>
    %18 = arith.addf %15, %17 : vector<8x32xf32>
    %c0_8 = arith.constant 0 : index
    %c0_9 = arith.constant 0 : index
    %19 = vector.load %arg5[%c0_8, %c0_9] : memref<1x32xf32, #tpu.memory_space<vmem>>, vector<1x32xf32>
    %20 = vector.broadcast %19 : vector<1x32xf32> to vector<8x32xf32>
    %21 = arith.addf %18, %20 : vector<8x32xf32>
    %cst_10 = arith.constant 0.000000e+00 : f32
    %22 = vector.broadcast %cst_10 : f32 to vector<8x32xf32>
    %23 = arith.maximumf %21, %22 : vector<8x32xf32>
    %24 = arith.truncf %23 : vector<8x32xf32> to vector<8x32xbf16>
    %c0_11 = arith.constant 0 : index
    %c0_12 = arith.constant 0 : index
    %25 = vector.load %arg6[%c0_11, %c0_12] : memref<32x32xbf16, #tpu.memory_space<vmem>>, vector<32x32xbf16>
    %cst_13 = arith.constant dense<0.000000e+00> : vector<8x32xf32>
    %26 = tpu.matmul %24, %25, %cst_13 {dimension_numbers = #tpu.dot_dimension_numbers<[1], [0], [0], [1], [0, 0, 1, 1], [], []>} : vector<8x32xbf16>, vector<32x32xbf16>, vector<8x32xf32> -> vector<8x32xf32>
    %c0_14 = arith.constant 0 : index
    %c0_15 = arith.constant 0 : index
    %27 = vector.load %arg7[%c0_14, %c0_15] : memref<1x32xf32, #tpu.memory_space<vmem>>, vector<1x32xf32>
    %28 = vector.broadcast %27 : vector<1x32xf32> to vector<8x32xf32>
    %29 = arith.addf %26, %28 : vector<8x32xf32>
    %cst_16 = arith.constant 0.000000e+00 : f32
    %30 = vector.broadcast %cst_16 : f32 to vector<8x32xf32>
    %31 = arith.maximumf %29, %30 : vector<8x32xf32>
    %32 = arith.truncf %31 : vector<8x32xf32> to vector<8x32xbf16>
    %c0_17 = arith.constant 0 : index
    %c0_18 = arith.constant 0 : index
    %33 = vector.load %arg8[%c0_17, %c0_18] : memref<32x32xbf16, #tpu.memory_space<vmem>>, vector<32x32xbf16>
    %cst_19 = arith.constant dense<0.000000e+00> : vector<8x32xf32>
    %34 = tpu.matmul %32, %33, %cst_19 {dimension_numbers = #tpu.dot_dimension_numbers<[1], [0], [0], [1], [0, 0, 1, 1], [], []>} : vector<8x32xbf16>, vector<32x32xbf16>, vector<8x32xf32> -> vector<8x32xf32>
    %c0_20 = arith.constant 0 : index
    %c0_21 = arith.constant 0 : index
    %35 = vector.load %arg9[%c0_20, %c0_21] : memref<1x32xf32, #tpu.memory_space<vmem>>, vector<1x32xf32>
    %36 = vector.broadcast %35 : vector<1x32xf32> to vector<8x32xf32>
    %37 = arith.addf %34, %36 : vector<8x32xf32>
    %cst_22 = arith.constant 0.000000e+00 : f32
    %38 = vector.broadcast %cst_22 : f32 to vector<8x32xf32>
    %39 = arith.maximumf %37, %38 : vector<8x32xf32>
    %40 = arith.truncf %39 : vector<8x32xf32> to vector<8x32xbf16>
    %c0_23 = arith.constant 0 : index
    %c0_24 = arith.constant 0 : index
    %41 = vector.load %arg10[%c0_23, %c0_24] : memref<32x1xbf16, #tpu.memory_space<vmem>>, vector<32x1xbf16>
    %cst_25 = arith.constant dense<0.000000e+00> : vector<8x1xf32>
    %42 = tpu.matmul %40, %41, %cst_25 {dimension_numbers = #tpu.dot_dimension_numbers<[1], [0], [0], [1], [0, 0, 1, 1], [], []>} : vector<8x32xbf16>, vector<32x1xbf16>, vector<8x1xf32> -> vector<8x1xf32>
    %c0_26 = arith.constant 0 : index
    %c0_27 = arith.constant 0 : index
    %43 = vector.load %arg11[%c0_26, %c0_27] : memref<1x1xf32, #tpu.memory_space<vmem>>, vector<1x1xf32>
    %44 = vector.broadcast %43 : vector<1x1xf32> to vector<8x1xf32>
    %45 = arith.addf %42, %44 : vector<8x1xf32>
    %cst_28 = arith.constant 0.000000e+00 : f32
    %46 = vector.broadcast %cst_28 : f32 to vector<8x1xf32>
    %47 = arith.subf %46, %45 : vector<8x1xf32>
    %48 = math.exp %47 : vector<8x1xf32>
    %cst_29 = arith.constant 1.000000e+00 : f32
    %49 = vector.broadcast %cst_29 : f32 to vector<8x1xf32>
    %50 = arith.addf %49, %48 : vector<8x1xf32>
    %51 = tpu.reciprocal %50 {approx = true} : vector<8x1xf32> -> vector<8x1xf32>
    %c0_30 = arith.constant 0 : index
    %c0_31 = arith.constant 0 : index
    %52 = vector.load %arg12[%c0_30, %c0_31] : memref<8x1xf32, #tpu.memory_space<vmem>>, vector<8x1xf32>
    tpu.vector_store %arg12[%c0_30, %c0_31], %51 {strides = array<i32>} : memref<8x1xf32, #tpu.memory_space<vmem>>, vector<8x1xf32>,
    return
  }
  func.func @transform_0(%arg0: i32) -> (i32, i32) {
    %c0_i32 = arith.constant 0 : i32
    %c0_i32_0 = arith.constant 0 : i32
    return %arg0, %c0_i32 : i32, i32
  }
  func.func @transform_1(%arg0: i32) -> (i32, i32) {
    %c0_i32 = arith.constant 0 : i32
    %c0_i32_0 = arith.constant 0 : i32
    return %arg0, %c0_i32 : i32, i32
  }
  func.func @transform_2(%arg0: i32) -> (i32, i32) {
    %c0_i32 = arith.constant 0 : i32
    %c0_i32_0 = arith.constant 0 : i32
    %c0_i32_1 = arith.constant 0 : i32
    return %c0_i32, %c0_i32_0 : i32, i32
  }
  func.func @transform_3(%arg0: i32) -> (i32, i32) {
    %c0_i32 = arith.constant 0 : i32
    %c0_i32_0 = arith.constant 0 : i32
    %c0_i32_1 = arith.constant 0 : i32
    return %c0_i32, %c0_i32_0 : i32, i32
  }
  func.func @transform_4(%arg0: i32) -> (i32, i32) {
    %c0_i32 = arith.constant 0 : i32
    %c0_i32_0 = arith.constant 0 : i32
    %c0_i32_1 = arith.constant 0 : i32
    return %c0_i32, %c0_i32_0 : i32, i32
  }
  func.func @transform_5(%arg0: i32) -> (i32, i32) {
    %c0_i32 = arith.constant 0 : i32
    %c0_i32_0 = arith.constant 0 : i32
    %c0_i32_1 = arith.constant 0 : i32
    return %c0_i32, %c0_i32_0 : i32, i32
  }
  func.func @transform_6(%arg0: i32) -> (i32, i32) {
    %c0_i32 = arith.constant 0 : i32
    %c0_i32_0 = arith.constant 0 : i32
    %c0_i32_1 = arith.constant 0 : i32
    return %c0_i32, %c0_i32_0 : i32, i32
  }
  func.func @transform_7(%arg0: i32) -> (i32, i32) {
    %c0_i32 = arith.constant 0 : i32
    %c0_i32_0 = arith.constant 0 : i32
    %c0_i32_1 = arith.constant 0 : i32
    return %c0_i32, %c0_i32_0 : i32, i32
  }
  func.func @transform_8(%arg0: i32) -> (i32, i32) {
    %c0_i32 = arith.constant 0 : i32
    %c0_i32_0 = arith.constant 0 : i32
    %c0_i32_1 = arith.constant 0 : i32
    return %c0_i32, %c0_i32_0 : i32, i32
  }
  func.func @transform_9(%arg0: i32) -> (i32, i32) {
    %c0_i32 = arith.constant 0 : i32
    %c0_i32_0 = arith.constant 0 : i32
    %c0_i32_1 = arith.constant 0 : i32
    return %c0_i32, %c0_i32_0 : i32, i32
  }
  func.func @transform_10(%arg0: i32) -> (i32, i32) {
    %c0_i32 = arith.constant 0 : i32
    %c0_i32_0 = arith.constant 0 : i32
    %c0_i32_1 = arith.constant 0 : i32
    return %c0_i32, %c0_i32_0 : i32, i32
  }
  func.func @transform_11(%arg0: i32) -> (i32, i32) {
    %c0_i32 = arith.constant 0 : i32
    %c0_i32_0 = arith.constant 0 : i32
    return %arg0, %c0_i32 : i32, i32
  }
}

</mosaic_0001>

<llo_original>
// kernel: tpu_custom_call.1
$region0: #{tpu_custom_call.1}
  #allocation0 [shape = 'u32[]', space=smem, size = 0x4, offset = 0x4, fixed_abs, tag = 'smem constant byte address 0x4 - core index']
  #allocation1 [shape = 'u32[144,128]{1,0:T(1,128)}', space=vmem, size = 0x12000, scoped, tag = 'internal scratch']
  #allocation2 [shape = 'f32[1,1]{1,0:T(1,128)S(1)}', space=vmem, size = 0x200, scoped, tag = 'scoped memory for tpu_custom_call.1']
  %s0 = inlined_call_operand.vmem [shape: s32[8,1], index: 0, kind: input, shape index: {}]
  %s1 = inlined_call_operand.vmem [shape: s32[8,1], index: 1, kind: input, shape index: {}]
  %s2 = inlined_call_operand.vmem [shape: bf16[16,32], index: 2, kind: input, shape index: {}]
  %s3 = inlined_call_operand.vmem [shape: bf16[4,32], index: 3, kind: input, shape index: {}]
  %s4 = inlined_call_operand.vmem [shape: f32[1,32], index: 4, kind: input, shape index: {}]
  %s5 = inlined_call_operand.vmem [shape: bf16[32,32], index: 5, kind: input, shape index: {}]
  %s6 = inlined_call_operand.vmem [shape: f32[1,32], index: 6, kind: input, shape index: {}]
  %s7 = inlined_call_operand.vmem [shape: bf16[32,32], index: 7, kind: input, shape index: {}]
  %s8 = inlined_call_operand.vmem [shape: f32[1,32], index: 8, kind: input, shape index: {}]
  %s9 = inlined_call_operand.vmem [shape: bf16[32,1], index: 9, kind: input, shape index: {}]
  %s10 = inlined_call_operand.<no memory space> [shape: f32[1,1], index: 10, kind: input, shape index: {}]
  %s11 = inlined_call_operand.vmem [shape: f32[8,1], index: 11, kind: output, shape index: {}]
  %s12 = sld [smem:[#allocation0]]
  $region54: #{tpu_custom_call.1} parent=0
    _
  %s14 = ssub.s32 1, %s12
  %s15 = scalar_select 0, %s14, %s12
  %v16 = vstv %s10
  %17 = vst [vmem:[#allocation2] sm:$0x1] %v16
  // Predicated region
  $region2: #{tpu_custom_call.1} parent=0 // pred_check
    _
  $region3: #{tpu_custom_call.1} parent=0 // pred_check_branch
    %19 = sbr.rel (0) target = $region5
  $region4: #{tpu_custom_call.1} parent=0 // pred_region
    _
  $region5: #{tpu_custom_call.1} parent=0 // pred_fallthru
    _
  // Predicated region
  $region6: #{tpu_custom_call.1} parent=0 // pred_check
    _
  $region7: #{tpu_custom_call.1} parent=0 // pred_check_branch
    %21 = sbr.rel (0) target = $region9
  $region8: #{tpu_custom_call.1} parent=0 // pred_region
    _
  $region9: #{tpu_custom_call.1} parent=0 // pred_fallthru
    _
  // Predicated region
  $region10: #{tpu_custom_call.1} parent=0 // pred_check
    _
  $region11: #{tpu_custom_call.1} parent=0 // pred_check_branch
    %23 = sbr.rel (0) target = $region13
  $region12: #{tpu_custom_call.1} parent=0 // pred_region
    _
  $region13: #{tpu_custom_call.1} parent=0 // pred_fallthru
    _
  // Predicated region
  $region14: #{tpu_custom_call.1} parent=0 // pred_check
    _
  $region15: #{tpu_custom_call.1} parent=0 // pred_check_branch
    %25 = sbr.rel (0) target = $region17
  $region16: #{tpu_custom_call.1} parent=0 // pred_region
    _
  $region17: #{tpu_custom_call.1} parent=0 // pred_fallthru
    _
  // Predicated region
  $region18: #{tpu_custom_call.1} parent=0 // pred_check
    _
  $region19: #{tpu_custom_call.1} parent=0 // pred_check_branch
    %27 = sbr.rel (0) target = $region21
  $region20: #{tpu_custom_call.1} parent=0 // pred_region
    _
  $region21: #{tpu_custom_call.1} parent=0 // pred_fallthru
    _
  // Predicated region
  $region22: #{tpu_custom_call.1} parent=0 // pred_check
    _
  $region23: #{tpu_custom_call.1} parent=0 // pred_check_branch
    %29 = sbr.rel (0) target = $region25
  $region24: #{tpu_custom_call.1} parent=0 // pred_region
    _
  $region25: #{tpu_custom_call.1} parent=0 // pred_fallthru
    _
  // Predicated region
  $region26: #{tpu_custom_call.1} parent=0 // pred_check
    _
  $region27: #{tpu_custom_call.1} parent=0 // pred_check_branch
    %31 = sbr.rel (0) target = $region29
  $region28: #{tpu_custom_call.1} parent=0 // pred_region
    _
  $region29: #{tpu_custom_call.1} parent=0 // pred_fallthru
    _
  // Predicated region
  $region30: #{tpu_custom_call.1} parent=0 // pred_check
    _
  $region31: #{tpu_custom_call.1} parent=0 // pred_check_branch
    %33 = sbr.rel (0) target = $region33
  $region32: #{tpu_custom_call.1} parent=0 // pred_region
    _
  $region33: #{tpu_custom_call.1} parent=0 // pred_fallthru
    _
  // Predicated region
  $region34: #{tpu_custom_call.1} parent=0 // pred_check
    _
  $region35: #{tpu_custom_call.1} parent=0 // pred_check_branch
    %35 = sbr.rel (0) target = $region37
  $region36: #{tpu_custom_call.1} parent=0 // pred_region
    _
  $region37: #{tpu_custom_call.1} parent=0 // pred_fallthru
    _
  // Predicated region
  $region38: #{tpu_custom_call.1} parent=0 // pred_check
    _
  $region39: #{tpu_custom_call.1} parent=0 // pred_check_branch
    %37 = sbr.rel (0) target = $region41
  $region40: #{tpu_custom_call.1} parent=0 // pred_region
    _
  $region41: #{tpu_custom_call.1} parent=0 // pred_fallthru
    _
  // Predicated region
  $region42: #{tpu_custom_call.1} parent=0 // pred_check
    _
  $region43: #{tpu_custom_call.1} parent=0 // pred_check_branch
    %39 = sbr.rel (0) target = $region45
  $region44: #{tpu_custom_call.1} parent=0 // pred_region
    _
  $region45: #{tpu_custom_call.1} parent=0 // pred_fallthru
    _
  %v41 = vld [vmem:[%s0] sm:$0xff]
  %v42 = vld [vmem:[%s1] sm:$0xff]
  %v43 = vlaneseq
  %v44 = vand.u32 %v43, 127
  %45 = vset.pattern.permute.xlu0 0
  %46 = vperm.xlu0 %45, %v41
  %v47 = vpop.permute.xlu0 %46
  %vm48 = vcmp.eq.s32.totalorder %v44, %v47
  %v49 = vsel %vm48, 1, 0
  %v50 = vcvt.s32.f32 %v49
  %v51 = vpack.c.bf16 %v50, %v50
  %52 = vset.pattern.permute.xlu0 0
  %53 = vperm.xlu0 %52, %v42
  %v54 = vpop.permute.xlu0 %53
  %vm55 = vcmp.eq.s32.totalorder %v44, %v54
  %v56 = vsel %vm55, 1, 0
  %v57 = vcvt.s32.f32 %v56
  %v58 = vpack.c.bf16 %v57, %v57
  %v59 = vld [vmem:[%s2] sm:$0xf]
  %v60 = vld [vmem:[%s2 + $0x4] sm:$0xf]
  %v61 = vld [vmem:[%s3] sm:$0x3]
  %vm62 = vcmask 31744
  %v64 = vsel %vm62, %v58, 0
  %vm66 = vcmask 1041408
  %v68 = vsel %vm66, %v61, 0
  %70 = vmatprep.subr.bf16.mxu0 0
  %71 = vmatpush1.bf16.msra.mxu0 0
  %72 = vmatprep.subr.bf16.mxu0 0
  %73 = vmatpush1.bf16.msra.mxu0 0
  %74 = vmatprep.subr.bf16.mxu0 0
  %75 = vmatpush1.bf16.msra.mxu0 0
  %76 = vmatprep.subr.bf16.mxu0 0
  %77 = vmatpush1.bf16.msra.mxu0 0
  %78 = vmatprep.subr.bf16.mxu0 0
  %79 = vmatpush1.bf16.msra.mxu0 0
  %80 = vmatprep.subr.bf16.mxu0 0
  %81 = vmatpush1.bf16.msra.mxu0 0
  %82 = vmatprep.subr.bf16.mxu0 0
  %83 = vmatpush1.bf16.msra.mxu0 0
  %84 = vmatprep.subr.bf16.mxu0 0
  %85 = vmatpush1.bf16.msra.mxu0 %v68
  %86 = vmatprep.subr.bf16.mxu0 0
  %87 = vmatpush2.bf16.msra.mxu0 0
  %88 = vmatprep.subr.bf16.mxu0 0
  %89 = vmatpush2.bf16.msra.mxu0 0
  %90 = vmatprep.subr.bf16.mxu0 0
  %91 = vmatpush2.bf16.msra.mxu0 0
  %92 = vmatprep.subr.bf16.mxu0 0
  %93 = vmatpush2.bf16.msra.mxu0 0
  %94 = vmatprep.subr.bf16.mxu0 0
  %95 = vmatpush2.bf16.msra.mxu0 0
  %96 = vmatprep.subr.bf16.mxu0 0
  %97 = vmatpush2.bf16.msra.mxu0 0
  %98 = vmatprep.subr.bf16.mxu0 0
  %99 = vmatpush2.bf16.msra.mxu0 0
  %100 = vmatprep.subr.bf16.mxu0 0
  %101 = vmatpush2.bf16.msra.mxu0 0
  %102 = vmatprep.mubr.bf16.mxu0 0
  %103 = vmatmul.mubr.bf16.gmra.mxu0 %v64
  %v104 = vpop.f32.mrf.mxu0
  %v105 = vadd.f32 0.0, %v104
  %v106 = vpop.f32.mrf.mxu0
  %v107 = vpop.f32.mrf.mxu0
  %v108 = vpop.f32.mrf.mxu0
  %109 = vdwg.mxu0
  %v112 = vunpack.c.l.b16 %v59
  %v113 = vunpack.c.l.b16 %v60
  %v114 = vpack.c.b16 %v113, %v112
  %vm116 = vcmask 130048
  %v118 = vsel %vm116, %v51, 0
  %120 = vmatprep.subr.bf16.mxu0 0
  %121 = vmatpush1.bf16.msra.mxu0 0
  %122 = vmatprep.subr.bf16.mxu0 0
  %123 = vmatpush1.bf16.msra.mxu0 0
  %124 = vmatprep.subr.bf16.mxu0 0
  %125 = vmatpush1.bf16.msra.mxu0 0
  %126 = vmatprep.subr.bf16.mxu0 0
  %127 = vmatpush1.bf16.msra.mxu0 0
  %128 = vmatprep.subr.bf16.mxu0 0
  %129 = vmatpush1.bf16.msra.mxu0 0
  %130 = vmatprep.subr.bf16.mxu0 0
  %131 = vmatpush1.bf16.msra.mxu0 0
  %132 = vmatprep.subr.bf16.mxu0 0
  %133 = vmatpush1.bf16.msra.mxu0 0
  %134 = vmatprep.subr.bf16.mxu0 0
  %135 = vmatpush1.bf16.msra.mxu0 %v114
  %136 = vmatprep.subr.bf16.mxu0 0
  %137 = vmatpush2.bf16.msra.mxu0 0
  %138 = vmatprep.subr.bf16.mxu0 0
  %139 = vmatpush2.bf16.msra.mxu0 0
  %140 = vmatprep.subr.bf16.mxu0 0
  %141 = vmatpush2.bf16.msra.mxu0 0
  %142 = vmatprep.subr.bf16.mxu0 0
  %143 = vmatpush2.bf16.msra.mxu0 0
  %144 = vmatprep.subr.bf16.mxu0 0
  %145 = vmatpush2.bf16.msra.mxu0 0
  %146 = vmatprep.subr.bf16.mxu0 0
  %147 = vmatpush2.bf16.msra.mxu0 0
  %148 = vmatprep.subr.bf16.mxu0 0
  %149 = vmatpush2.bf16.msra.mxu0 0
  %150 = vmatprep.subr.bf16.mxu0 0
  %151 = vmatpush2.bf16.msra.mxu0 0
  %152 = vmatprep.mubr.bf16.mxu0 0
  %153 = vmatmul.mubr.bf16.gmra.mxu0 %v118
  %v154 = vpop.f32.mrf.mxu0
  %v155 = vadd.f32 %v105, %v154
  %v156 = vpop.f32.mrf.mxu0
  %v157 = vpop.f32.mrf.mxu0
  %v158 = vpop.f32.mrf.mxu0
  %159 = vdwg.mxu0
  %v160 = vld [vmem:[%s4] sm:$0x1]
  %v162 = vlaneseq
  %v163 = vshrl.u32 %v162, 7
  %v164 = vsub.s32 0, %v163
  %v165 = vrot.slane %v160, %v164
  %v167 = vadd.f32 %v155, %v165
  %v168 = vmax.f32 %v167, 0.0
  %v169 = vpack.c.bf16 %v168, %v168
  %v170 = vld [vmem:[%s5] sm:$0xf]
  %v171 = vld [vmem:[%s5 + $0x4] sm:$0xf]
  %v172 = vld [vmem:[%s5 + $0x8] sm:$0xf]
  %v173 = vld [vmem:[%s5 + $0xc] sm:$0xf]
  %v174 = vld [vmem:[%s6] sm:$0x1]
  %v176 = vlaneseq
  %v177 = vshrl.u32 %v176, 7
  %v178 = vsub.s32 0, %v177
  %v179 = vrot.slane %v174, %v178
  %v185 = vunpack.c.l.b16 %v170
  %v186 = vunpack.c.l.b16 %v171
  %v187 = vunpack.c.l.b16 %v172
  %v188 = vunpack.c.l.b16 %v173
  %v189 = vpack.c.b16 %v186, %v185
  %v190 = vpack.c.b16 %v188, %v187
  %vm193 = vcmask 261120
  %v195 = vsel %vm193, %v169, 0
  %197 = vmatprep.subr.bf16.mxu0 0
  %198 = vmatpush1.bf16.msra.mxu0 0
  %199 = vmatprep.subr.bf16.mxu0 0
  %200 = vmatpush1.bf16.msra.mxu0 0
  %201 = vmatprep.subr.bf16.mxu0 0
  %202 = vmatpush1.bf16.msra.mxu0 0
  %203 = vmatprep.subr.bf16.mxu0 0
  %204 = vmatpush1.bf16.msra.mxu0 0
  %205 = vmatprep.subr.bf16.mxu0 0
  %206 = vmatpush1.bf16.msra.mxu0 0
  %207 = vmatprep.subr.bf16.mxu0 0
  %208 = vmatpush1.bf16.msra.mxu0 0
  %209 = vmatprep.subr.bf16.mxu0 0
  %210 = vmatpush1.bf16.msra.mxu0 %v190
  %211 = vmatprep.subr.bf16.mxu0 0
  %212 = vmatpush1.bf16.msra.mxu0 %v189
  %213 = vmatprep.subr.bf16.mxu0 0
  %214 = vmatpush2.bf16.msra.mxu0 0
  %215 = vmatprep.subr.bf16.mxu0 0
  %216 = vmatpush2.bf16.msra.mxu0 0
  %217 = vmatprep.subr.bf16.mxu0 0
  %218 = vmatpush2.bf16.msra.mxu0 0
  %219 = vmatprep.subr.bf16.mxu0 0
  %220 = vmatpush2.bf16.msra.mxu0 0
  %221 = vmatprep.subr.bf16.mxu0 0
  %222 = vmatpush2.bf16.msra.mxu0 0
  %223 = vmatprep.subr.bf16.mxu0 0
  %224 = vmatpush2.bf16.msra.mxu0 0
  %225 = vmatprep.subr.bf16.mxu0 0
  %226 = vmatpush2.bf16.msra.mxu0 0
  %227 = vmatprep.subr.bf16.mxu0 0
  %228 = vmatpush2.bf16.msra.mxu0 0
  %229 = vmatprep.mubr.bf16.mxu0 0
  %230 = vmatmul.mubr.bf16.gmra.mxu0 %v195
  %v231 = vpop.f32.mrf.mxu0
  %v232 = vadd.f32 %v179, %v231
  %v233 = vpop.f32.mrf.mxu0
  %v234 = vpop.f32.mrf.mxu0
  %v235 = vpop.f32.mrf.mxu0
  %236 = vdwg.mxu0
  %v237 = vmax.f32 %v232, 0.0
  %v238 = vpack.c.bf16 %v237, %v237
  %v239 = vld [vmem:[%s7] sm:$0xf]
  %v240 = vld [vmem:[%s7 + $0x4] sm:$0xf]
  %v241 = vld [vmem:[%s7 + $0x8] sm:$0xf]
  %v242 = vld [vmem:[%s7 + $0xc] sm:$0xf]
  %v243 = vld [vmem:[%s8] sm:$0x1]
  %v245 = vlaneseq
  %v246 = vshrl.u32 %v245, 7
  %v247 = vsub.s32 0, %v246
  %v248 = vrot.slane %v243, %v247
  %v254 = vunpack.c.l.b16 %v239
  %v255 = vunpack.c.l.b16 %v240
  %v256 = vunpack.c.l.b16 %v241
  %v257 = vunpack.c.l.b16 %v242
  %v258 = vpack.c.b16 %v255, %v254
  %v259 = vpack.c.b16 %v257, %v256
  %v263 = vsel %vm193, %v238, 0
  %265 = vmatprep.subr.bf16.mxu0 0
  %266 = vmatpush1.bf16.msra.mxu0 0
  %267 = vmatprep.subr.bf16.mxu0 0
  %268 = vmatpush1.bf16.msra.mxu0 0
  %269 = vmatprep.subr.bf16.mxu0 0
  %270 = vmatpush1.bf16.msra.mxu0 0
  %271 = vmatprep.subr.bf16.mxu0 0
  %272 = vmatpush1.bf16.msra.mxu0 0
  %273 = vmatprep.subr.bf16.mxu0 0
  %274 = vmatpush1.bf16.msra.mxu0 0
  %275 = vmatprep.subr.bf16.mxu0 0
  %276 = vmatpush1.bf16.msra.mxu0 0
  %277 = vmatprep.subr.bf16.mxu0 0
  %278 = vmatpush1.bf16.msra.mxu0 %v259
  %279 = vmatprep.subr.bf16.mxu0 0
  %280 = vmatpush1.bf16.msra.mxu0 %v258
  %281 = vmatprep.subr.bf16.mxu0 0
  %282 = vmatpush2.bf16.msra.mxu0 0
  %283 = vmatprep.subr.bf16.mxu0 0
  %284 = vmatpush2.bf16.msra.mxu0 0
  %285 = vmatprep.subr.bf16.mxu0 0
  %286 = vmatpush2.bf16.msra.mxu0 0
  %287 = vmatprep.subr.bf16.mxu0 0
  %288 = vmatpush2.bf16.msra.mxu0 0
  %289 = vmatprep.subr.bf16.mxu0 0
  %290 = vmatpush2.bf16.msra.mxu0 0
  %291 = vmatprep.subr.bf16.mxu0 0
  %292 = vmatpush2.bf16.msra.mxu0 0
  %293 = vmatprep.subr.bf16.mxu0 0
  %294 = vmatpush2.bf16.msra.mxu0 0
  %295 = vmatprep.subr.bf16.mxu0 0
  %296 = vmatpush2.bf16.msra.mxu0 0
  %297 = vmatprep.mubr.bf16.mxu0 0
  %298 = vmatmul.mubr.bf16.gmra.mxu0 %v263
  %v299 = vpop.f32.mrf.mxu0
  %v300 = vadd.f32 %v248, %v299
  %v301 = vpop.f32.mrf.mxu0
  %v302 = vpop.f32.mrf.mxu0
  %v303 = vpop.f32.mrf.mxu0
  %304 = vdwg.mxu0
  %v305 = vmax.f32 %v300, 0.0
  %v306 = vpack.c.bf16 %v305, %v305
  %v307 = vld [vmem:[%s9] sm:$0xf]
  %v308 = vld [vmem:[%s9 + $0x4] sm:$0xf]
  %v309 = vld [vmem:[%s9 + $0x8] sm:$0xf]
  %v310 = vld [vmem:[%s9 + $0xc] sm:$0xf]
  %v311 = vld [vmem:[#allocation2] sm:$0x1]
  %v313 = vlaneseq
  %v314 = vshrl.u32 %v313, 7
  %v315 = vsub.s32 0, %v314
  %v316 = vrot.slane %v311, %v315
  %v322 = vunpack.c.l.b16 %v307
  %v323 = vunpack.c.l.b16 %v308
  %v324 = vunpack.c.l.b16 %v309
  %v325 = vunpack.c.l.b16 %v310
  %v326 = vpack.c.b16 %v323, %v322
  %v327 = vpack.c.b16 %v325, %v324
  %v331 = vsel %vm193, %v306, 0
  %333 = vmatprep.subr.bf16.mxu0 0
  %334 = vmatpush1.bf16.msra.mxu0 0
  %335 = vmatprep.subr.bf16.mxu0 0
  %336 = vmatpush1.bf16.msra.mxu0 0
  %337 = vmatprep.subr.bf16.mxu0 0
  %338 = vmatpush1.bf16.msra.mxu0 0
  %339 = vmatprep.subr.bf16.mxu0 0
  %340 = vmatpush1.bf16.msra.mxu0 0
  %341 = vmatprep.subr.bf16.mxu0 0
  %342 = vmatpush1.bf16.msra.mxu0 0
  %343 = vmatprep.subr.bf16.mxu0 0
  %344 = vmatpush1.bf16.msra.mxu0 0
  %345 = vmatprep.subr.bf16.mxu0 0
  %346 = vmatpush1.bf16.msra.mxu0 %v327
  %347 = vmatprep.subr.bf16.mxu0 0
  %348 = vmatpush1.bf16.msra.mxu0 %v326
  %349 = vmatprep.subr.bf16.mxu0 0
  %350 = vmatpush2.bf16.msra.mxu0 0
  %351 = vmatprep.subr.bf16.mxu0 0
  %352 = vmatpush2.bf16.msra.mxu0 0
  %353 = vmatprep.subr.bf16.mxu0 0
  %354 = vmatpush2.bf16.msra.mxu0 0
  %355 = vmatprep.subr.bf16.mxu0 0
  %356 = vmatpush2.bf16.msra.mxu0 0
  %357 = vmatprep.subr.bf16.mxu0 0
  %358 = vmatpush2.bf16.msra.mxu0 0
  %359 = vmatprep.subr.bf16.mxu0 0
  %360 = vmatpush2.bf16.msra.mxu0 0
  %361 = vmatprep.subr.bf16.mxu0 0
  %362 = vmatpush2.bf16.msra.mxu0 0
  %363 = vmatprep.subr.bf16.mxu0 0
  %364 = vmatpush2.bf16.msra.mxu0 0
  %365 = vmatprep.mubr.bf16.mxu0 0
  %366 = vmatmul.mubr.bf16.gmra.mxu0 %v331
  %v367 = vpop.f32.mrf.mxu0
  %v368 = vadd.f32 %v316, %v367
  %v369 = vpop.f32.mrf.mxu0
  %v370 = vpop.f32.mrf.mxu0
  %v371 = vpop.f32.mrf.mxu0
  %372 = vdwg.mxu0
  %v373 = vsub.f32 0.0, %v368
  %v374 = vmul.f32 %v373, 1.442695
  %v375 = vpow.pop %v374
  %v376 = vadd.f32 %v375, 1.0
  %v377 = vrcp.pop %v376
  %vm378 = vcmask 7168
  %379 = vst.msk [vmem:[%s11] sm:$0xff] %vm378, %v377
  // Predicated region
  $region46: #{tpu_custom_call.1} parent=0 // pred_check
    _
  $region47: #{tpu_custom_call.1} parent=0 // pred_check_branch
    %381 = sbr.rel (0) target = $region49
  $region48: #{tpu_custom_call.1} parent=0 // pred_region
    _
  $region49: #{tpu_custom_call.1} parent=0 // pred_fallthru
    _
  // Predicated region
  $region50: #{tpu_custom_call.1} parent=0 // pred_check
    _
  $region51: #{tpu_custom_call.1} parent=0 // pred_check_branch
    %383 = sbr.rel (0) target = $region53
  $region52: #{tpu_custom_call.1} parent=0 // pred_region
    _
  $region53: #{tpu_custom_call.1} parent=0 // pred_fallthru
    _

</llo_original>
